<compile_context>
chip_gen: v6e
topology: v6e:2x2x1
jax: 0.10.0
libtpu: 0.0.40
codegen_flags: <defaults>
</compile_context>

<pallas_src>
import functools

import jax
import jax.numpy as jnp
import numpy as np
from jax.experimental import pallas as pl
from jax.experimental.pallas import tpu as pltpu

HIDDEN_SIZE = 16
INPUT_SIZE = 1
OUTPUT_SIZE = 1
SLAB_LANES = 128


def counting_rnn_kernel(slab_ref, out_ref, *, batch, seq_len):
    """Whole forward pass, fully VMEM/register resident, fed by ONE packed slab.

    slab_ref : (rows, 128) f32, rows >= max(T*B, H+4), laid out as
        [0:H,       0:H    ]  W_hh^T
        [H,         0:H    ]  W_ih^T            (input_size == 1 -> one row)
        [H+1,       0:H    ]  b_ih + b_hh
        [H+2,       0:H    ]  fc weight         (output_size == 1 -> one row)
        [H+3,       0:H    ]  fc bias (replicated along the row)
        [0:T*B,     H:2H   ]  mask, time-major, pre-broadcast along H (row t*B+b)
        [0:T*B,     2H     ]  x, time-major column (row t*B+b)
    out_ref  : (B, 1) f32
    """
    B, T, H = batch, seq_len, HIDDEN_SIZE

    # --- prologue: static slices of the single slab (no extra DMAs, off the chain) ---
    w_hh_t   = slab_ref[0:H, 0:H]                    # (H, H)
    w_ih_row = slab_ref[H:H + 1, 0:H]                # (1, H)
    b_row    = slab_ref[H + 1:H + 2, 0:H]            # (1, H)
    w_fc     = slab_ref[H + 2:H + 3, 0:H]            # (1, H)
    b_fc     = slab_ref[H + 3:H + 4, 0:1]            # (1, 1)
    m_all    = slab_ref[0:T * B, H:2 * H]            # (T*B, H)
    x_col    = slab_ref[0:T * B, 2 * H:2 * H + 1]    # (T*B, 1)

    # Hoisted input projection + bias: one vectorized block for all timesteps.
    pre_flat = x_col * w_ih_row + b_row              # (T*B, H)

    # Serial recurrence: only dot + add + tanh per step; h/acc live in vregs.
    # (T=8 is small and static, so a fully unrolled Python loop is fine.)
    h = jnp.zeros((B, H), jnp.float32)
    acc = jnp.zeros((B, H), jnp.float32)
    msum = jnp.zeros((B, H), jnp.float32)
    for t in range(T):
        lo = t * B
        h = jnp.tanh(pre_flat[lo:lo + B, :]
                     + jnp.dot(h, w_hh_t, preferred_element_type=jnp.float32))
        m_t = m_all[lo:lo + B, :]                    # static sublane-tile select
        acc = acc + h * m_t                          # off the tanh chain; VALU filler
        msum = msum + m_t

    # Masked mean over time (mask_sum == 0 -> 1e-8, matching PyTorch code).
    msum = jnp.where(msum == 0.0, jnp.float32(1e-8), msum)
    mean = acc / msum                                                 # (B, H)

    # fc: (B, H) @ (H, 1) as a lane reduction (output_size == 1).
    out_ref[...] = jnp.sum(mean * w_fc, axis=1, keepdims=True) + b_fc  # (B, 1)


def counting_rnn_forward(x, mask, params):
    """x, mask: (B, T) float32. Returns (B, 1) float32."""
    B, T = x.shape
    H = HIDDEN_SIZE
    assert 2 * H + 1 <= SLAB_LANES, "lane budget exceeded"

    rows = max(T * B, H + 4)
    rows = ((rows + 7) // 8) * 8

    # Layout plumbing only (single lane-dense slab, one DMA); no compute hoisted
    # out of the kernel besides parameter packing.
    x_col = jnp.transpose(x).astype(jnp.float32).reshape(T * B, 1)          # row = t*B + b
    m_b = jnp.broadcast_to(
        jnp.transpose(mask).astype(jnp.float32).reshape(T * B, 1), (T * B, H))

    slab = jnp.zeros((rows, SLAB_LANES), jnp.float32)
    slab = slab.at[0:H, 0:H].set(params["w_hh"].T)
    slab = slab.at[H, 0:H].set(params["w_ih"].reshape(H))
    slab = slab.at[H + 1, 0:H].set(params["b_ih"] + params["b_hh"])
    slab = slab.at[H + 2, 0:H].set(params["w_fc"].reshape(H))
    slab = slab.at[H + 3, 0:H].set(jnp.broadcast_to(params["b_fc"].reshape(1), (H,)))
    slab = slab.at[0:T * B, H:2 * H].set(m_b)
    slab = slab.at[0:T * B, 2 * H:2 * H + 1].set(x_col)

    vmem = pl.BlockSpec(memory_space=pltpu.MemorySpace.VMEM)
    out = pl.pallas_call(
        functools.partial(counting_rnn_kernel, batch=B, seq_len=T),
        out_shape=jax.ShapeDtypeStruct((B, OUTPUT_SIZE), jnp.float32),
        in_specs=[vmem],
        out_specs=vmem,
    )(slab)
    return out


def counting_rnn_reference(x, mask, params):
    """Pure-JAX reference mirroring the PyTorch forward, for correctness checking."""
    B, T = x.shape
    H = HIDDEN_SIZE
    h = jnp.zeros((B, H), jnp.float32)
    outs = []
    for t in range(T):
        h = jnp.tanh(x[:, t:t + 1] @ params["w_ih"].T
                     + params["b_ih"][None, :]
                     + h @ params["w_hh"].T
                     + params["b_hh"][None, :])
        outs.append(h)
    out = jnp.stack(outs, axis=1)                       # (B, T, H)
    out = out * mask[:, :, None]
    mask_sum = jnp.sum(mask, axis=1, keepdims=True)
    mask_sum = jnp.where(mask_sum == 0.0, 1e-8, mask_sum)
    out = jnp.sum(out, axis=1) / mask_sum               # (B, H)
    return out @ params["w_fc"].T + params["b_fc"][None, :]


def init_params(key):
    """Deterministic init, same shapes as nn.RNN(1,16) + nn.Linear(16,1)."""
    ks = jax.random.split(key, 6)
    H = HIDDEN_SIZE
    bound = 1.0 / np.sqrt(H)
    u = lambda k, shape: jax.random.uniform(k, shape, jnp.float32, -bound, bound)
    return {
        "w_ih": u(ks[0], (H, INPUT_SIZE)),   # weight_ih_l0
        "w_hh": u(ks[1], (H, H)),            # weight_hh_l0
        "b_ih": u(ks[2], (H,)),              # bias_ih_l0
        "b_hh": u(ks[3], (H,)),              # bias_hh_l0
        "w_fc": u(ks[4], (OUTPUT_SIZE, H)),  # fc.weight
        "b_fc": u(ks[5], (OUTPUT_SIZE,)),    # fc.bias
    }


if __name__ == "__main__":
    key = jax.random.PRNGKey(0)
    k_param, k_x, k_m = jax.random.split(key, 3)

    B, T = 8, 8
    params = init_params(k_param)
    # x: counting-task sequence values; mask: binary padding mask.
    x = jax.random.randint(k_x, (B, T), 0, 3).astype(jnp.float32)
    mask = (jax.random.uniform(k_m, (B, T)) < 0.7).astype(jnp.float32)

    out = counting_rnn_forward(x, mask, params)
    out = jax.block_until_ready(out)

    ref = counting_rnn_reference(x, mask, params)
    np.testing.assert_allclose(np.asarray(out), np.asarray(ref), rtol=1e-5, atol=1e-5)

    assert out.shape == (B, OUTPUT_SIZE) and out.dtype == jnp.float32
    print("KERNEL_OK")
</pallas_src>

<mosaic_0001>
module attributes {stable_mosaic.version = 11 : i64} {
  func.func @counting_rnn_kernel(%arg0: memref<64x128xf32, #tpu.memory_space<vmem>>, %arg1: memref<8x1xf32, #tpu.memory_space<vmem>>) attributes {dimension_semantics = [], scalar_prefetch = 0 : i64, scratch_operands = 0 : i64, tpu.core_type = #tpu.core_type<tc>} {
    %c0 = arith.constant 0 : index
    %c0_0 = arith.constant 0 : index
    %0 = vector.load %arg0[%c0, %c0_0] : memref<64x128xf32, #tpu.memory_space<vmem>>, vector<16x16xf32>
    %c16 = arith.constant 16 : index
    %c0_1 = arith.constant 0 : index
    %1 = vector.load %arg0[%c16, %c0_1] : memref<64x128xf32, #tpu.memory_space<vmem>>, vector<1x16xf32>
    %c17 = arith.constant 17 : index
    %c0_2 = arith.constant 0 : index
    %2 = vector.load %arg0[%c17, %c0_2] : memref<64x128xf32, #tpu.memory_space<vmem>>, vector<1x16xf32>
    %c18 = arith.constant 18 : index
    %c0_3 = arith.constant 0 : index
    %3 = vector.load %arg0[%c18, %c0_3] : memref<64x128xf32, #tpu.memory_space<vmem>>, vector<1x16xf32>
    %c19 = arith.constant 19 : index
    %c0_4 = arith.constant 0 : index
    %4 = vector.load %arg0[%c19, %c0_4] : memref<64x128xf32, #tpu.memory_space<vmem>>, vector<1x1xf32>
    %c0_5 = arith.constant 0 : index
    %c16_6 = arith.constant 16 : index
    %5 = vector.load %arg0[%c0_5, %c16_6] : memref<64x128xf32, #tpu.memory_space<vmem>>, vector<64x16xf32>
    %c0_7 = arith.constant 0 : index
    %c32 = arith.constant 32 : index
    %6 = vector.load %arg0[%c0_7, %c32] : memref<64x128xf32, #tpu.memory_space<vmem>>, vector<64x1xf32>
    %7 = vector.broadcast %6 : vector<64x1xf32> to vector<64x16xf32>
    %8 = vector.broadcast %1 : vector<1x16xf32> to vector<64x16xf32>
    %9 = arith.mulf %7, %8 : vector<64x16xf32>
    %10 = vector.broadcast %2 : vector<1x16xf32> to vector<64x16xf32>
    %11 = arith.addf %9, %10 : vector<64x16xf32>
    %cst = arith.constant 0.000000e+00 : f32
    %12 = vector.broadcast %cst : f32 to vector<8x16xf32>
    %cst_8 = arith.constant 0.000000e+00 : f32
    %13 = vector.broadcast %cst_8 : f32 to vector<8x16xf32>
    %cst_9 = arith.constant 0.000000e+00 : f32
    %14 = vector.broadcast %cst_9 : f32 to vector<8x16xf32>
    %15 = vector.extract_strided_slice %11 {offsets = [0, 0], sizes = [8, 16], strides = [1, 1]} : vector<64x16xf32> to vector<8x16xf32>
    %cst_10 = arith.constant dense<0.000000e+00> : vector<8x16xf32>
    %16 = tpu.matmul %12, %0, %cst_10 {dimension_numbers = #tpu.dot_dimension_numbers<[1], [0], [0], [1], [0, 0, 1, 1], [], []>} : vector<8x16xf32>, vector<16x16xf32>, vector<8x16xf32> -> vector<8x16xf32>
    %17 = arith.addf %15, %16 : vector<8x16xf32>
    %18 = math.tanh %17 : vector<8x16xf32>
    %19 = vector.extract_strided_slice %5 {offsets = [0, 0], sizes = [8, 16], strides = [1, 1]} : vector<64x16xf32> to vector<8x16xf32>
    %20 = arith.mulf %18, %19 : vector<8x16xf32>
    %21 = arith.addf %13, %20 : vector<8x16xf32>
    %22 = arith.addf %14, %19 : vector<8x16xf32>
    %23 = vector.extract_strided_slice %11 {offsets = [8, 0], sizes = [8, 16], strides = [1, 1]} : vector<64x16xf32> to vector<8x16xf32>
    %cst_11 = arith.constant dense<0.000000e+00> : vector<8x16xf32>
    %24 = tpu.matmul %18, %0, %cst_11 {dimension_numbers = #tpu.dot_dimension_numbers<[1], [0], [0], [1], [0, 0, 1, 1], [], []>} : vector<8x16xf32>, vector<16x16xf32>, vector<8x16xf32> -> vector<8x16xf32>
    %25 = arith.addf %23, %24 : vector<8x16xf32>
    %26 = math.tanh %25 : vector<8x16xf32>
    %27 = vector.extract_strided_slice %5 {offsets = [8, 0], sizes = [8, 16], strides = [1, 1]} : vector<64x16xf32> to vector<8x16xf32>
    %28 = arith.mulf %26, %27 : vector<8x16xf32>
    %29 = arith.addf %21, %28 : vector<8x16xf32>
    %30 = arith.addf %22, %27 : vector<8x16xf32>
    %31 = vector.extract_strided_slice %11 {offsets = [16, 0], sizes = [8, 16], strides = [1, 1]} : vector<64x16xf32> to vector<8x16xf32>
    %cst_12 = arith.constant dense<0.000000e+00> : vector<8x16xf32>
    %32 = tpu.matmul %26, %0, %cst_12 {dimension_numbers = #tpu.dot_dimension_numbers<[1], [0], [0], [1], [0, 0, 1, 1], [], []>} : vector<8x16xf32>, vector<16x16xf32>, vector<8x16xf32> -> vector<8x16xf32>
    %33 = arith.addf %31, %32 : vector<8x16xf32>
    %34 = math.tanh %33 : vector<8x16xf32>
    %35 = vector.extract_strided_slice %5 {offsets = [16, 0], sizes = [8, 16], strides = [1, 1]} : vector<64x16xf32> to vector<8x16xf32>
    %36 = arith.mulf %34, %35 : vector<8x16xf32>
    %37 = arith.addf %29, %36 : vector<8x16xf32>
    %38 = arith.addf %30, %35 : vector<8x16xf32>
    %39 = vector.extract_strided_slice %11 {offsets = [24, 0], sizes = [8, 16], strides = [1, 1]} : vector<64x16xf32> to vector<8x16xf32>
    %cst_13 = arith.constant dense<0.000000e+00> : vector<8x16xf32>
    %40 = tpu.matmul %34, %0, %cst_13 {dimension_numbers = #tpu.dot_dimension_numbers<[1], [0], [0], [1], [0, 0, 1, 1], [], []>} : vector<8x16xf32>, vector<16x16xf32>, vector<8x16xf32> -> vector<8x16xf32>
    %41 = arith.addf %39, %40 : vector<8x16xf32>
    %42 = math.tanh %41 : vector<8x16xf32>
    %43 = vector.extract_strided_slice %5 {offsets = [24, 0], sizes = [8, 16], strides = [1, 1]} : vector<64x16xf32> to vector<8x16xf32>
    %44 = arith.mulf %42, %43 : vector<8x16xf32>
    %45 = arith.addf %37, %44 : vector<8x16xf32>
    %46 = arith.addf %38, %43 : vector<8x16xf32>
    %47 = vector.extract_strided_slice %11 {offsets = [32, 0], sizes = [8, 16], strides = [1, 1]} : vector<64x16xf32> to vector<8x16xf32>
    %cst_14 = arith.constant dense<0.000000e+00> : vector<8x16xf32>
    %48 = tpu.matmul %42, %0, %cst_14 {dimension_numbers = #tpu.dot_dimension_numbers<[1], [0], [0], [1], [0, 0, 1, 1], [], []>} : vector<8x16xf32>, vector<16x16xf32>, vector<8x16xf32> -> vector<8x16xf32>
    %49 = arith.addf %47, %48 : vector<8x16xf32>
    %50 = math.tanh %49 : vector<8x16xf32>
    %51 = vector.extract_strided_slice %5 {offsets = [32, 0], sizes = [8, 16], strides = [1, 1]} : vector<64x16xf32> to vector<8x16xf32>
    %52 = arith.mulf %50, %51 : vector<8x16xf32>
    %53 = arith.addf %45, %52 : vector<8x16xf32>
    %54 = arith.addf %46, %51 : vector<8x16xf32>
    %55 = vector.extract_strided_slice %11 {offsets = [40, 0], sizes = [8, 16], strides = [1, 1]} : vector<64x16xf32> to vector<8x16xf32>
    %cst_15 = arith.constant dense<0.000000e+00> : vector<8x16xf32>
    %56 = tpu.matmul %50, %0, %cst_15 {dimension_numbers = #tpu.dot_dimension_numbers<[1], [0], [0], [1], [0, 0, 1, 1], [], []>} : vector<8x16xf32>, vector<16x16xf32>, vector<8x16xf32> -> vector<8x16xf32>
    %57 = arith.addf %55, %56 : vector<8x16xf32>
    %58 = math.tanh %57 : vector<8x16xf32>
    %59 = vector.extract_strided_slice %5 {offsets = [40, 0], sizes = [8, 16], strides = [1, 1]} : vector<64x16xf32> to vector<8x16xf32>
    %60 = arith.mulf %58, %59 : vector<8x16xf32>
    %61 = arith.addf %53, %60 : vector<8x16xf32>
    %62 = arith.addf %54, %59 : vector<8x16xf32>
    %63 = vector.extract_strided_slice %11 {offsets = [48, 0], sizes = [8, 16], strides = [1, 1]} : vector<64x16xf32> to vector<8x16xf32>
    %cst_16 = arith.constant dense<0.000000e+00> : vector<8x16xf32>
    %64 = tpu.matmul %58, %0, %cst_16 {dimension_numbers = #tpu.dot_dimension_numbers<[1], [0], [0], [1], [0, 0, 1, 1], [], []>} : vector<8x16xf32>, vector<16x16xf32>, vector<8x16xf32> -> vector<8x16xf32>
    %65 = arith.addf %63, %64 : vector<8x16xf32>
    %66 = math.tanh %65 : vector<8x16xf32>
    %67 = vector.extract_strided_slice %5 {offsets = [48, 0], sizes = [8, 16], strides = [1, 1]} : vector<64x16xf32> to vector<8x16xf32>
    %68 = arith.mulf %66, %67 : vector<8x16xf32>
    %69 = arith.addf %61, %68 : vector<8x16xf32>
    %70 = arith.addf %62, %67 : vector<8x16xf32>
    %71 = vector.extract_strided_slice %11 {offsets = [56, 0], sizes = [8, 16], strides = [1, 1]} : vector<64x16xf32> to vector<8x16xf32>
    %cst_17 = arith.constant dense<0.000000e+00> : vector<8x16xf32>
    %72 = tpu.matmul %66, %0, %cst_17 {dimension_numbers = #tpu.dot_dimension_numbers<[1], [0], [0], [1], [0, 0, 1, 1], [], []>} : vector<8x16xf32>, vector<16x16xf32>, vector<8x16xf32> -> vector<8x16xf32>
    %73 = arith.addf %71, %72 : vector<8x16xf32>
    %74 = math.tanh %73 : vector<8x16xf32>
    %75 = vector.extract_strided_slice %5 {offsets = [56, 0], sizes = [8, 16], strides = [1, 1]} : vector<64x16xf32> to vector<8x16xf32>
    %76 = arith.mulf %74, %75 : vector<8x16xf32>
    %77 = arith.addf %69, %76 : vector<8x16xf32>
    %78 = arith.addf %70, %75 : vector<8x16xf32>
    %cst_18 = arith.constant 0.000000e+00 : f32
    %79 = vector.broadcast %cst_18 : f32 to vector<8x16xf32>
    %80 = arith.cmpf oeq, %78, %79 : vector<8x16xf32>
    %cst_19 = arith.constant 9.99999993E-9 : f32
    %81 = vector.broadcast %cst_19 : f32 to vector<8x16xf32>
    %82 = arith.select %80, %81, %78 : vector<8x16xi1>, vector<8x16xf32>
    %83 = arith.divf %77, %82 : vector<8x16xf32>
    %84 = vector.broadcast %3 : vector<1x16xf32> to vector<8x16xf32>
    %85 = arith.mulf %83, %84 : vector<8x16xf32>
    %cst_20 = arith.constant dense<0.000000e+00> : vector<8xf32>
    %86 = vector.multi_reduction <add>, %85, %cst_20 [1] : vector<8x16xf32> to vector<8xf32>
    %87 = vector.shape_cast %86 : vector<8xf32> to vector<8x1xf32>
    %88 = vector.broadcast %4 : vector<1x1xf32> to vector<8x1xf32>
    %89 = arith.addf %87, %88 : vector<8x1xf32>
    %c0_21 = arith.constant 0 : index
    %c0_22 = arith.constant 0 : index
    %90 = vector.load %arg1[%c0_21, %c0_22] : memref<8x1xf32, #tpu.memory_space<vmem>>, vector<8x1xf32>
    tpu.vector_store %arg1[%c0_21, %c0_22], %89 {strides = array<i32>} : memref<8x1xf32, #tpu.memory_space<vmem>>, vector<8x1xf32>,
    return
  }
}

</mosaic_0001>

<llo_original>
// kernel: tpu_custom_call.1
$region0: #{tpu_custom_call.1}
  #allocation0 [shape = 'u32[]', space=smem, size = 0x4, offset = 0x4, fixed_abs, tag = 'smem constant byte address 0x4 - core index']
  #allocation1 [shape = 'u32[144,128]{1,0:T(1,128)}', space=vmem, size = 0x12000, scoped, tag = 'internal scratch']
  %s0 = inlined_call_operand.hbm [shape: f32[64,128], index: 0, kind: input, shape index: {}]
  %s1 = inlined_call_operand.vmem [shape: f32[8,1], index: 1, kind: output, shape index: {}]
  %s2 = sld [smem:[#allocation0]]
  $region18: #{tpu_custom_call.1} parent=0
    _
  %s4 = ssub.s32 1, %s2
  %s5 = scalar_select 0, %s4, %s2
  $region1: #{tpu_custom_call.1} parent=0
    #allocation2 [shape = 'u8[32768]{0}', space=vmem, size = 0x8000, scoped, tag = 'input window, operand 0, single buffered']
    #allocation3 [shape = 's32[1]{0}', space=sflag, size = 0x4, scoped, tag = 'scoped memory for tpu_custom_call.1']
    %6 = vsyncpa [#allocation3], 0
    // Predicated region
    $region2: #{tpu_custom_call.1} parent=1 // pred_check
      _
    $region3: #{tpu_custom_call.1} parent=1 // pred_check_branch
      %8 = sbr.rel (0) target = $region5
    $region4: #{tpu_custom_call.1} parent=1 // pred_region
      %s10 = ssub.s32 1024, 1024
      %11 = vsyncadd [#allocation3], %s10
      %s12 = sshll.u32 [#allocation2], 4
      %s13 = int_to_ptr.vmem [resolvable:$true] %s12
      %18 = dma.hbm_to_vmem [thread:$0]  %s0, 1024, %s13, [#allocation3], 128, 128, 8
    $region5: #{tpu_custom_call.1} parent=1 // pred_fallthru
      _
    // Predicated region
    $region6: #{tpu_custom_call.1} parent=1 // pred_check
      _
    $region7: #{tpu_custom_call.1} parent=1 // pred_check_branch
      %20 = sbr.rel (0) target = $region9
    $region8: #{tpu_custom_call.1} parent=1 // pred_region
      %21 = dma.done [#allocation3], 1024
    $region9: #{tpu_custom_call.1} parent=1 // pred_fallthru
      _
    %v22 = vld [vmem:[#allocation2] sm:$0xff]
    %v23 = vld [vmem:[#allocation2 + $0x8] sm:$0xff]
    %v24 = vld [vmem:[#allocation2 + $0x10] sm:$0x1]
    %v25 = vld [vmem:[#allocation2 + $0x11] sm:$0x1]
    %v26 = vld [vmem:[#allocation2 + $0x12] sm:$0x1]
    %v27 = vld [vmem:[#allocation2 + $0x13] sm:$0x1]
    %v28 = vld [vmem:[#allocation2] sm:$0xff]
    %v29 = vld [vmem:[#allocation2 + $0x8] sm:$0xff]
    %v30 = vld [vmem:[#allocation2 + $0x10] sm:$0xff]
    %v31 = vld [vmem:[#allocation2 + $0x18] sm:$0xff]
    %v32 = vld [vmem:[#allocation2 + $0x20] sm:$0xff]
    %v33 = vld [vmem:[#allocation2 + $0x28] sm:$0xff]
    %v34 = vld [vmem:[#allocation2 + $0x30] sm:$0xff]
    %v35 = vld [vmem:[#allocation2 + $0x38] sm:$0xff]
    %37 = vset.pattern.permute.xlu0 32
    %38 = vperm.xlu0 %37, %v28
    %v39 = vpop.permute.xlu0 %38
    %42 = vset.pattern.permute.xlu0 32
    %43 = vperm.xlu0 %42, %v29
    %v44 = vpop.permute.xlu0 %43
    %47 = vset.pattern.permute.xlu0 32
    %48 = vperm.xlu0 %47, %v30
    %v49 = vpop.permute.xlu0 %48
    %52 = vset.pattern.permute.xlu0 32
    %53 = vperm.xlu0 %52, %v31
    %v54 = vpop.permute.xlu0 %53
    %57 = vset.pattern.permute.xlu0 32
    %58 = vperm.xlu0 %57, %v32
    %v59 = vpop.permute.xlu0 %58
    %62 = vset.pattern.permute.xlu0 32
    %63 = vperm.xlu0 %62, %v33
    %v64 = vpop.permute.xlu0 %63
    %67 = vset.pattern.permute.xlu0 32
    %68 = vperm.xlu0 %67, %v34
    %v69 = vpop.permute.xlu0 %68
    %72 = vset.pattern.permute.xlu0 32
    %73 = vperm.xlu0 %72, %v35
    %v74 = vpop.permute.xlu0 %73
    %v76 = vlaneseq
    %v77 = vshrl.u32 %v76, 7
    %v78 = vsub.s32 0, %v77
    %v79 = vrot.slane %v24, %v78
    %v80 = vmul.f32 %v39, %v79
    %v81 = vmul.f32 %v44, %v79
    %v82 = vmul.f32 %v49, %v79
    %v83 = vmul.f32 %v54, %v79
    %v84 = vmul.f32 %v59, %v79
    %v85 = vmul.f32 %v64, %v79
    %v86 = vmul.f32 %v69, %v79
    %v87 = vmul.f32 %v74, %v79
    %v88 = vlaneseq
    %v89 = vshrl.u32 %v88, 7
    %v90 = vsub.s32 0, %v89
    %v91 = vrot.slane %v25, %v90
    %v92 = vadd.f32 %v80, %v91
    %v93 = vadd.f32 %v81, %v91
    %v94 = vadd.f32 %v82, %v91
    %v95 = vadd.f32 %v83, %v91
    %v96 = vadd.f32 %v84, %v91
    %v97 = vadd.f32 %v85, %v91
    %v98 = vadd.f32 %v86, %v91
    %v99 = vadd.f32 %v87, %v91
    %vm100 = vcmask 130048
    %v102 = vsel %vm100, 0.0, 0
    %104 = vmatprep.subr.mxu0 0.0
    %105 = vmatpush1.msra.mxu0 0.0
    %106 = vmatprep.subr.mxu0 0.0
    %107 = vmatpush1.msra.mxu0 0.0
    %108 = vmatprep.subr.mxu0 0.0
    %109 = vmatpush1.msra.mxu0 0.0
    %110 = vmatprep.subr.mxu0 0.0
    %111 = vmatpush1.msra.mxu0 0.0
    %112 = vmatprep.subr.mxu0 0.0
    %113 = vmatpush1.msra.mxu0 0.0
    %114 = vmatprep.subr.mxu0 0.0
    %115 = vmatpush1.msra.mxu0 0.0
    %116 = vmatprep.subr.mxu0 0.0
    %117 = vmatpush1.msra.mxu0 0.0
    %118 = vmatprep.subr.mxu0 0.0
    %119 = vmatpush1.msra.mxu0 0.0
    %120 = vmatprep.subr.mxu0 0.0
    %121 = vmatpush1.msra.mxu0 0.0
    %122 = vmatprep.subr.mxu0 0.0
    %123 = vmatpush1.msra.mxu0 0.0
    %124 = vmatprep.subr.mxu0 0.0
    %125 = vmatpush1.msra.mxu0 0.0
    %126 = vmatprep.subr.mxu0 0.0
    %127 = vmatpush1.msra.mxu0 0.0
    %128 = vmatprep.subr.mxu0 0.0
    %129 = vmatpush1.msra.mxu0 0.0
    %130 = vmatprep.subr.mxu0 0.0
    %131 = vmatpush1.msra.mxu0 0.0
    %132 = vmatprep.subr.mxu0 0.0
    %133 = vmatpush1.msra.mxu0 %v23
    %134 = vmatprep.subr.mxu0 0.0
    %135 = vmatpush1.msra.mxu0 %v22
    %136 = vmatprep.subr.mxu0 0.0
    %137 = vmatpush2.msra.mxu0 0.0
    %138 = vmatprep.subr.mxu0 0.0
    %139 = vmatpush2.msra.mxu0 0.0
    %140 = vmatprep.subr.mxu0 0.0
    %141 = vmatpush2.msra.mxu0 0.0
    %142 = vmatprep.subr.mxu0 0.0
    %143 = vmatpush2.msra.mxu0 0.0
    %144 = vmatprep.subr.mxu0 0.0
    %145 = vmatpush2.msra.mxu0 0.0
    %146 = vmatprep.subr.mxu0 0.0
    %147 = vmatpush2.msra.mxu0 0.0
    %148 = vmatprep.subr.mxu0 0.0
    %149 = vmatpush2.msra.mxu0 0.0
    %150 = vmatprep.subr.mxu0 0.0
    %151 = vmatpush2.msra.mxu0 0.0
    %152 = vmatprep.subr.mxu0 0.0
    %153 = vmatpush2.msra.mxu0 0.0
    %154 = vmatprep.subr.mxu0 0.0
    %155 = vmatpush2.msra.mxu0 0.0
    %156 = vmatprep.subr.mxu0 0.0
    %157 = vmatpush2.msra.mxu0 0.0
    %158 = vmatprep.subr.mxu0 0.0
    %159 = vmatpush2.msra.mxu0 0.0
    %160 = vmatprep.subr.mxu0 0.0
    %161 = vmatpush2.msra.mxu0 0.0
    %162 = vmatprep.subr.mxu0 0.0
    %163 = vmatpush2.msra.mxu0 0.0
    %164 = vmatprep.subr.mxu0 0.0
    %165 = vmatpush2.msra.mxu0 0.0
    %166 = vmatprep.subr.mxu0 0.0
    %167 = vmatpush2.msra.mxu0 0.0
    %168 = vmatprep.mubr.f32.mxu0 0.0
    %169 = vmatmul.mubr.f32.gmra.mxu0 %v102
    %v170 = vpop.f32.mrf.mxu0
    %v171 = vadd.f32 0.0, %v170
    %v172 = vpop.f32.mrf.mxu0
    %173 = vdwg.mxu0
    %v174 = vadd.f32 %v92, %v171
    %v175 = vtanh.pop %v174
    %176 = vrot.lane.b32.xlu0 %v28, 112
    %v177 = vpop.permute.xlu0 %176
    %v179 = vmul.f32 %v175, %v177
    %v180 = vadd.f32 %v179, 0.0
    %v181 = vadd.f32 %v28, 0.0
    %v183 = vsel %vm100, %v175, 0
    %185 = vmatprep.subr.mxu0 0.0
    %186 = vmatpush1.msra.mxu0 0.0
    %187 = vmatprep.subr.mxu0 0.0
    %188 = vmatpush1.msra.mxu0 0.0
    %189 = vmatprep.subr.mxu0 0.0
    %190 = vmatpush1.msra.mxu0 0.0
    %191 = vmatprep.subr.mxu0 0.0
    %192 = vmatpush1.msra.mxu0 0.0
    %193 = vmatprep.subr.mxu0 0.0
    %194 = vmatpush1.msra.mxu0 0.0
    %195 = vmatprep.subr.mxu0 0.0
    %196 = vmatpush1.msra.mxu0 0.0
    %197 = vmatprep.subr.mxu0 0.0
    %198 = vmatpush1.msra.mxu0 0.0
    %199 = vmatprep.subr.mxu0 0.0
    %200 = vmatpush1.msra.mxu0 0.0
    %201 = vmatprep.subr.mxu0 0.0
    %202 = vmatpush1.msra.mxu0 0.0
    %203 = vmatprep.subr.mxu0 0.0
    %204 = vmatpush1.msra.mxu0 0.0
    %205 = vmatprep.subr.mxu0 0.0
    %206 = vmatpush1.msra.mxu0 0.0
    %207 = vmatprep.subr.mxu0 0.0
    %208 = vmatpush1.msra.mxu0 0.0
    %209 = vmatprep.subr.mxu0 0.0
    %210 = vmatpush1.msra.mxu0 0.0
    %211 = vmatprep.subr.mxu0 0.0
    %212 = vmatpush1.msra.mxu0 0.0
    %213 = vmatprep.subr.mxu0 0.0
    %214 = vmatpush1.msra.mxu0 %v23
    %215 = vmatprep.subr.mxu0 0.0
    %216 = vmatpush1.msra.mxu0 %v22
    %217 = vmatprep.subr.mxu0 0.0
    %218 = vmatpush2.msra.mxu0 0.0
    %219 = vmatprep.subr.mxu0 0.0
    %220 = vmatpush2.msra.mxu0 0.0
    %221 = vmatprep.subr.mxu0 0.0
    %222 = vmatpush2.msra.mxu0 0.0
    %223 = vmatprep.subr.mxu0 0.0
    %224 = vmatpush2.msra.mxu0 0.0
    %225 = vmatprep.subr.mxu0 0.0
    %226 = vmatpush2.msra.mxu0 0.0
    %227 = vmatprep.subr.mxu0 0.0
    %228 = vmatpush2.msra.mxu0 0.0
    %229 = vmatprep.subr.mxu0 0.0
    %230 = vmatpush2.msra.mxu0 0.0
    %231 = vmatprep.subr.mxu0 0.0
    %232 = vmatpush2.msra.mxu0 0.0
    %233 = vmatprep.subr.mxu0 0.0
    %234 = vmatpush2.msra.mxu0 0.0
    %235 = vmatprep.subr.mxu0 0.0
    %236 = vmatpush2.msra.mxu0 0.0
    %237 = vmatprep.subr.mxu0 0.0
    %238 = vmatpush2.msra.mxu0 0.0
    %239 = vmatprep.subr.mxu0 0.0
    %240 = vmatpush2.msra.mxu0 0.0
    %241 = vmatprep.subr.mxu0 0.0
    %242 = vmatpush2.msra.mxu0 0.0
    %243 = vmatprep.subr.mxu0 0.0
    %244 = vmatpush2.msra.mxu0 0.0
    %245 = vmatprep.subr.mxu0 0.0
    %246 = vmatpush2.msra.mxu0 0.0
    %247 = vmatprep.subr.mxu0 0.0
    %248 = vmatpush2.msra.mxu0 0.0
    %249 = vmatprep.mubr.f32.mxu0 0.0
    %250 = vmatmul.mubr.f32.gmra.mxu0 %v183
    %v251 = vpop.f32.mrf.mxu0
    %v252 = vadd.f32 0.0, %v251
    %v253 = vpop.f32.mrf.mxu0
    %254 = vdwg.mxu0
    %v255 = vadd.f32 %v93, %v252
    %v256 = vtanh.pop %v255
    %257 = vrot.lane.b32.xlu0 %v29, 112
    %v258 = vpop.permute.xlu0 %257
    %v260 = vmul.f32 %v256, %v258
    %v261 = vadd.f32 %v180, %v260
    %v262 = vadd.f32 %v181, %v29
    %v264 = vsel %vm100, %v256, 0
    %266 = vmatprep.subr.mxu0 0.0
    %267 = vmatpush1.msra.mxu0 0.0
    %268 = vmatprep.subr.mxu0 0.0
    %269 = vmatpush1.msra.mxu0 0.0
    %270 = vmatprep.subr.mxu0 0.0
    %271 = vmatpush1.msra.mxu0 0.0
    %272 = vmatprep.subr.mxu0 0.0
    %273 = vmatpush1.msra.mxu0 0.0
    %274 = vmatprep.subr.mxu0 0.0
    %275 = vmatpush1.msra.mxu0 0.0
    %276 = vmatprep.subr.mxu0 0.0
    %277 = vmatpush1.msra.mxu0 0.0
    %278 = vmatprep.subr.mxu0 0.0
    %279 = vmatpush1.msra.mxu0 0.0
    %280 = vmatprep.subr.mxu0 0.0
    %281 = vmatpush1.msra.mxu0 0.0
    %282 = vmatprep.subr.mxu0 0.0
    %283 = vmatpush1.msra.mxu0 0.0
    %284 = vmatprep.subr.mxu0 0.0
    %285 = vmatpush1.msra.mxu0 0.0
    %286 = vmatprep.subr.mxu0 0.0
    %287 = vmatpush1.msra.mxu0 0.0
    %288 = vmatprep.subr.mxu0 0.0
    %289 = vmatpush1.msra.mxu0 0.0
    %290 = vmatprep.subr.mxu0 0.0
    %291 = vmatpush1.msra.mxu0 0.0
    %292 = vmatprep.subr.mxu0 0.0
    %293 = vmatpush1.msra.mxu0 0.0
    %294 = vmatprep.subr.mxu0 0.0
    %295 = vmatpush1.msra.mxu0 %v23
    %296 = vmatprep.subr.mxu0 0.0
    %297 = vmatpush1.msra.mxu0 %v22
    %298 = vmatprep.subr.mxu0 0.0
    %299 = vmatpush2.msra.mxu0 0.0
    %300 = vmatprep.subr.mxu0 0.0
    %301 = vmatpush2.msra.mxu0 0.0
    %302 = vmatprep.subr.mxu0 0.0
    %303 = vmatpush2.msra.mxu0 0.0
    %304 = vmatprep.subr.mxu0 0.0
    %305 = vmatpush2.msra.mxu0 0.0
    %306 = vmatprep.subr.mxu0 0.0
    %307 = vmatpush2.msra.mxu0 0.0
    %308 = vmatprep.subr.mxu0 0.0
    %309 = vmatpush2.msra.mxu0 0.0
    %310 = vmatprep.subr.mxu0 0.0
    %311 = vmatpush2.msra.mxu0 0.0
    %312 = vmatprep.subr.mxu0 0.0
    %313 = vmatpush2.msra.mxu0 0.0
    %314 = vmatprep.subr.mxu0 0.0
    %315 = vmatpush2.msra.mxu0 0.0
    %316 = vmatprep.subr.mxu0 0.0
    %317 = vmatpush2.msra.mxu0 0.0
    %318 = vmatprep.subr.mxu0 0.0
    %319 = vmatpush2.msra.mxu0 0.0
    %320 = vmatprep.subr.mxu0 0.0
    %321 = vmatpush2.msra.mxu0 0.0
    %322 = vmatprep.subr.mxu0 0.0
    %323 = vmatpush2.msra.mxu0 0.0
    %324 = vmatprep.subr.mxu0 0.0
    %325 = vmatpush2.msra.mxu0 0.0
    %326 = vmatprep.subr.mxu0 0.0
    %327 = vmatpush2.msra.mxu0 0.0
    %328 = vmatprep.subr.mxu0 0.0
    %329 = vmatpush2.msra.mxu0 0.0
    %330 = vmatprep.mubr.f32.mxu0 0.0
    %331 = vmatmul.mubr.f32.gmra.mxu0 %v264
    %v332 = vpop.f32.mrf.mxu0
    %v333 = vadd.f32 0.0, %v332
    %v334 = vpop.f32.mrf.mxu0
    %335 = vdwg.mxu0
    %v336 = vadd.f32 %v94, %v333
    %v337 = vtanh.pop %v336
    %338 = vrot.lane.b32.xlu0 %v30, 112
    %v339 = vpop.permute.xlu0 %338
    %v341 = vmul.f32 %v337, %v339
    %v342 = vadd.f32 %v261, %v341
    %v343 = vadd.f32 %v262, %v30
    %v345 = vsel %vm100, %v337, 0
    %347 = vmatprep.subr.mxu0 0.0
    %348 = vmatpush1.msra.mxu0 0.0
    %349 = vmatprep.subr.mxu0 0.0
    %350 = vmatpush1.msra.mxu0 0.0
    %351 = vmatprep.subr.mxu0 0.0
    %352 = vmatpush1.msra.mxu0 0.0
    %353 = vmatprep.subr.mxu0 0.0
    %354 = vmatpush1.msra.mxu0 0.0
    %355 = vmatprep.subr.mxu0 0.0
    %356 = vmatpush1.msra.mxu0 0.0
    %357 = vmatprep.subr.mxu0 0.0
    %358 = vmatpush1.msra.mxu0 0.0
    %359 = vmatprep.subr.mxu0 0.0
    %360 = vmatpush1.msra.mxu0 0.0
    %361 = vmatprep.subr.mxu0 0.0
    %362 = vmatpush1.msra.mxu0 0.0
    %363 = vmatprep.subr.mxu0 0.0
    %364 = vmatpush1.msra.mxu0 0.0
    %365 = vmatprep.subr.mxu0 0.0
    %366 = vmatpush1.msra.mxu0 0.0
    %367 = vmatprep.subr.mxu0 0.0
    %368 = vmatpush1.msra.mxu0 0.0
    %369 = vmatprep.subr.mxu0 0.0
    %370 = vmatpush1.msra.mxu0 0.0
    %371 = vmatprep.subr.mxu0 0.0
    %372 = vmatpush1.msra.mxu0 0.0
    %373 = vmatprep.subr.mxu0 0.0
    %374 = vmatpush1.msra.mxu0 0.0
    %375 = vmatprep.subr.mxu0 0.0
    %376 = vmatpush1.msra.mxu0 %v23
    %377 = vmatprep.subr.mxu0 0.0
    %378 = vmatpush1.msra.mxu0 %v22
    %379 = vmatprep.subr.mxu0 0.0
    %380 = vmatpush2.msra.mxu0 0.0
    %381 = vmatprep.subr.mxu0 0.0
    %382 = vmatpush2.msra.mxu0 0.0
    %383 = vmatprep.subr.mxu0 0.0
    %384 = vmatpush2.msra.mxu0 0.0
    %385 = vmatprep.subr.mxu0 0.0
    %386 = vmatpush2.msra.mxu0 0.0
    %387 = vmatprep.subr.mxu0 0.0
    %388 = vmatpush2.msra.mxu0 0.0
    %389 = vmatprep.subr.mxu0 0.0
    %390 = vmatpush2.msra.mxu0 0.0
    %391 = vmatprep.subr.mxu0 0.0
    %392 = vmatpush2.msra.mxu0 0.0
    %393 = vmatprep.subr.mxu0 0.0
    %394 = vmatpush2.msra.mxu0 0.0
    %395 = vmatprep.subr.mxu0 0.0
    %396 = vmatpush2.msra.mxu0 0.0
    %397 = vmatprep.subr.mxu0 0.0
    %398 = vmatpush2.msra.mxu0 0.0
    %399 = vmatprep.subr.mxu0 0.0
    %400 = vmatpush2.msra.mxu0 0.0
    %401 = vmatprep.subr.mxu0 0.0
    %402 = vmatpush2.msra.mxu0 0.0
    %403 = vmatprep.subr.mxu0 0.0
    %404 = vmatpush2.msra.mxu0 0.0
    %405 = vmatprep.subr.mxu0 0.0
    %406 = vmatpush2.msra.mxu0 0.0
    %407 = vmatprep.subr.mxu0 0.0
    %408 = vmatpush2.msra.mxu0 0.0
    %409 = vmatprep.subr.mxu0 0.0
    %410 = vmatpush2.msra.mxu0 0.0
    %411 = vmatprep.mubr.f32.mxu0 0.0
    %412 = vmatmul.mubr.f32.gmra.mxu0 %v345
    %v413 = vpop.f32.mrf.mxu0
    %v414 = vadd.f32 0.0, %v413
    %v415 = vpop.f32.mrf.mxu0
    %416 = vdwg.mxu0
    %v417 = vadd.f32 %v95, %v414
    %v418 = vtanh.pop %v417
    %419 = vrot.lane.b32.xlu0 %v31, 112
    %v420 = vpop.permute.xlu0 %419
    %v422 = vmul.f32 %v418, %v420
    %v423 = vadd.f32 %v342, %v422
    %v424 = vadd.f32 %v343, %v31
    %v426 = vsel %vm100, %v418, 0
    %428 = vmatprep.subr.mxu0 0.0
    %429 = vmatpush1.msra.mxu0 0.0
    %430 = vmatprep.subr.mxu0 0.0
    %431 = vmatpush1.msra.mxu0 0.0
    %432 = vmatprep.subr.mxu0 0.0
    %433 = vmatpush1.msra.mxu0 0.0
    %434 = vmatprep.subr.mxu0 0.0
    %435 = vmatpush1.msra.mxu0 0.0
    %436 = vmatprep.subr.mxu0 0.0
    %437 = vmatpush1.msra.mxu0 0.0
    %438 = vmatprep.subr.mxu0 0.0
    %439 = vmatpush1.msra.mxu0 0.0
    %440 = vmatprep.subr.mxu0 0.0
    %441 = vmatpush1.msra.mxu0 0.0
    %442 = vmatprep.subr.mxu0 0.0
    %443 = vmatpush1.msra.mxu0 0.0
    %444 = vmatprep.subr.mxu0 0.0
    %445 = vmatpush1.msra.mxu0 0.0
    %446 = vmatprep.subr.mxu0 0.0
    %447 = vmatpush1.msra.mxu0 0.0
    %448 = vmatprep.subr.mxu0 0.0
    %449 = vmatpush1.msra.mxu0 0.0
    %450 = vmatprep.subr.mxu0 0.0
    %451 = vmatpush1.msra.mxu0 0.0
    %452 = vmatprep.subr.mxu0 0.0
    %453 = vmatpush1.msra.mxu0 0.0
    %454 = vmatprep.subr.mxu0 0.0
    %455 = vmatpush1.msra.mxu0 0.0
    %456 = vmatprep.subr.mxu0 0.0
    %457 = vmatpush1.msra.mxu0 %v23
    %458 = vmatprep.subr.mxu0 0.0
    %459 = vmatpush1.msra.mxu0 %v22
    %460 = vmatprep.subr.mxu0 0.0
    %461 = vmatpush2.msra.mxu0 0.0
    %462 = vmatprep.subr.mxu0 0.0
    %463 = vmatpush2.msra.mxu0 0.0
    %464 = vmatprep.subr.mxu0 0.0
    %465 = vmatpush2.msra.mxu0 0.0
    %466 = vmatprep.subr.mxu0 0.0
    %467 = vmatpush2.msra.mxu0 0.0
    %468 = vmatprep.subr.mxu0 0.0
    %469 = vmatpush2.msra.mxu0 0.0
    %470 = vmatprep.subr.mxu0 0.0
    %471 = vmatpush2.msra.mxu0 0.0
    %472 = vmatprep.subr.mxu0 0.0
    %473 = vmatpush2.msra.mxu0 0.0
    %474 = vmatprep.subr.mxu0 0.0
    %475 = vmatpush2.msra.mxu0 0.0
    %476 = vmatprep.subr.mxu0 0.0
    %477 = vmatpush2.msra.mxu0 0.0
    %478 = vmatprep.subr.mxu0 0.0
    %479 = vmatpush2.msra.mxu0 0.0
    %480 = vmatprep.subr.mxu0 0.0
    %481 = vmatpush2.msra.mxu0 0.0
    %482 = vmatprep.subr.mxu0 0.0
    %483 = vmatpush2.msra.mxu0 0.0
    %484 = vmatprep.subr.mxu0 0.0
    %485 = vmatpush2.msra.mxu0 0.0
    %486 = vmatprep.subr.mxu0 0.0
    %487 = vmatpush2.msra.mxu0 0.0
    %488 = vmatprep.subr.mxu0 0.0
    %489 = vmatpush2.msra.mxu0 0.0
    %490 = vmatprep.subr.mxu0 0.0
    %491 = vmatpush2.msra.mxu0 0.0
    %492 = vmatprep.mubr.f32.mxu0 0.0
    %493 = vmatmul.mubr.f32.gmra.mxu0 %v426
    %v494 = vpop.f32.mrf.mxu0
    %v495 = vadd.f32 0.0, %v494
    %v496 = vpop.f32.mrf.mxu0
    %497 = vdwg.mxu0
    %v498 = vadd.f32 %v96, %v495
    %v499 = vtanh.pop %v498
    %500 = vrot.lane.b32.xlu0 %v32, 112
    %v501 = vpop.permute.xlu0 %500
    %v503 = vmul.f32 %v499, %v501
    %v504 = vadd.f32 %v423, %v503
    %v505 = vadd.f32 %v424, %v32
    %v507 = vsel %vm100, %v499, 0
    %509 = vmatprep.subr.mxu0 0.0
    %510 = vmatpush1.msra.mxu0 0.0
    %511 = vmatprep.subr.mxu0 0.0
    %512 = vmatpush1.msra.mxu0 0.0
    %513 = vmatprep.subr.mxu0 0.0
    %514 = vmatpush1.msra.mxu0 0.0
    %515 = vmatprep.subr.mxu0 0.0
    %516 = vmatpush1.msra.mxu0 0.0
    %517 = vmatprep.subr.mxu0 0.0
    %518 = vmatpush1.msra.mxu0 0.0
    %519 = vmatprep.subr.mxu0 0.0
    %520 = vmatpush1.msra.mxu0 0.0
    %521 = vmatprep.subr.mxu0 0.0
    %522 = vmatpush1.msra.mxu0 0.0
    %523 = vmatprep.subr.mxu0 0.0
    %524 = vmatpush1.msra.mxu0 0.0
    %525 = vmatprep.subr.mxu0 0.0
    %526 = vmatpush1.msra.mxu0 0.0
    %527 = vmatprep.subr.mxu0 0.0
    %528 = vmatpush1.msra.mxu0 0.0
    %529 = vmatprep.subr.mxu0 0.0
    %530 = vmatpush1.msra.mxu0 0.0
    %531 = vmatprep.subr.mxu0 0.0
    %532 = vmatpush1.msra.mxu0 0.0
    %533 = vmatprep.subr.mxu0 0.0
    %534 = vmatpush1.msra.mxu0 0.0
    %535 = vmatprep.subr.mxu0 0.0
    %536 = vmatpush1.msra.mxu0 0.0
    %537 = vmatprep.subr.mxu0 0.0
    %538 = vmatpush1.msra.mxu0 %v23
    %539 = vmatprep.subr.mxu0 0.0
    %540 = vmatpush1.msra.mxu0 %v22
    %541 = vmatprep.subr.mxu0 0.0
    %542 = vmatpush2.msra.mxu0 0.0
    %543 = vmatprep.subr.mxu0 0.0
    %544 = vmatpush2.msra.mxu0 0.0
    %545 = vmatprep.subr.mxu0 0.0
    %546 = vmatpush2.msra.mxu0 0.0
    %547 = vmatprep.subr.mxu0 0.0
    %548 = vmatpush2.msra.mxu0 0.0
    %549 = vmatprep.subr.mxu0 0.0
    %550 = vmatpush2.msra.mxu0 0.0
    %551 = vmatprep.subr.mxu0 0.0
    %552 = vmatpush2.msra.mxu0 0.0
    %553 = vmatprep.subr.mxu0 0.0
    %554 = vmatpush2.msra.mxu0 0.0
    %555 = vmatprep.subr.mxu0 0.0
    %556 = vmatpush2.msra.mxu0 0.0
    %557 = vmatprep.subr.mxu0 0.0
    %558 = vmatpush2.msra.mxu0 0.0
    %559 = vmatprep.subr.mxu0 0.0
    %560 = vmatpush2.msra.mxu0 0.0
    %561 = vmatprep.subr.mxu0 0.0
    %562 = vmatpush2.msra.mxu0 0.0
    %563 = vmatprep.subr.mxu0 0.0
    %564 = vmatpush2.msra.mxu0 0.0
    %565 = vmatprep.subr.mxu0 0.0
    %566 = vmatpush2.msra.mxu0 0.0
    %567 = vmatprep.subr.mxu0 0.0
    %568 = vmatpush2.msra.mxu0 0.0
    %569 = vmatprep.subr.mxu0 0.0
    %570 = vmatpush2.msra.mxu0 0.0
    %571 = vmatprep.subr.mxu0 0.0
    %572 = vmatpush2.msra.mxu0 0.0
    %573 = vmatprep.mubr.f32.mxu0 0.0
    %574 = vmatmul.mubr.f32.gmra.mxu0 %v507
    %v575 = vpop.f32.mrf.mxu0
    %v576 = vadd.f32 0.0, %v575
    %v577 = vpop.f32.mrf.mxu0
    %578 = vdwg.mxu0
    %v579 = vadd.f32 %v97, %v576
    %v580 = vtanh.pop %v579
    %581 = vrot.lane.b32.xlu0 %v33, 112
    %v582 = vpop.permute.xlu0 %581
    %v584 = vmul.f32 %v580, %v582
    %v585 = vadd.f32 %v504, %v584
    %v586 = vadd.f32 %v505, %v33
    %v588 = vsel %vm100, %v580, 0
    %590 = vmatprep.subr.mxu0 0.0
    %591 = vmatpush1.msra.mxu0 0.0
    %592 = vmatprep.subr.mxu0 0.0
    %593 = vmatpush1.msra.mxu0 0.0
    %594 = vmatprep.subr.mxu0 0.0
    %595 = vmatpush1.msra.mxu0 0.0
    %596 = vmatprep.subr.mxu0 0.0
    %597 = vmatpush1.msra.mxu0 0.0
    %598 = vmatprep.subr.mxu0 0.0
    %599 = vmatpush1.msra.mxu0 0.0
    %600 = vmatprep.subr.mxu0 0.0
    %601 = vmatpush1.msra.mxu0 0.0
    %602 = vmatprep.subr.mxu0 0.0
    %603 = vmatpush1.msra.mxu0 0.0
    %604 = vmatprep.subr.mxu0 0.0
    %605 = vmatpush1.msra.mxu0 0.0
    %606 = vmatprep.subr.mxu0 0.0
    %607 = vmatpush1.msra.mxu0 0.0
    %608 = vmatprep.subr.mxu0 0.0
    %609 = vmatpush1.msra.mxu0 0.0
    %610 = vmatprep.subr.mxu0 0.0
    %611 = vmatpush1.msra.mxu0 0.0
    %612 = vmatprep.subr.mxu0 0.0
    %613 = vmatpush1.msra.mxu0 0.0
    %614 = vmatprep.subr.mxu0 0.0
    %615 = vmatpush1.msra.mxu0 0.0
    %616 = vmatprep.subr.mxu0 0.0
    %617 = vmatpush1.msra.mxu0 0.0
    %618 = vmatprep.subr.mxu0 0.0
    %619 = vmatpush1.msra.mxu0 %v23
    %620 = vmatprep.subr.mxu0 0.0
    %621 = vmatpush1.msra.mxu0 %v22
    %622 = vmatprep.subr.mxu0 0.0
    %623 = vmatpush2.msra.mxu0 0.0
    %624 = vmatprep.subr.mxu0 0.0
    %625 = vmatpush2.msra.mxu0 0.0
    %626 = vmatprep.subr.mxu0 0.0
    %627 = vmatpush2.msra.mxu0 0.0
    %628 = vmatprep.subr.mxu0 0.0
    %629 = vmatpush2.msra.mxu0 0.0
    %630 = vmatprep.subr.mxu0 0.0
    %631 = vmatpush2.msra.mxu0 0.0
    %632 = vmatprep.subr.mxu0 0.0
    %633 = vmatpush2.msra.mxu0 0.0
    %634 = vmatprep.subr.mxu0 0.0
    %635 = vmatpush2.msra.mxu0 0.0
    %636 = vmatprep.subr.mxu0 0.0
    %637 = vmatpush2.msra.mxu0 0.0
    %638 = vmatprep.subr.mxu0 0.0
    %639 = vmatpush2.msra.mxu0 0.0
    %640 = vmatprep.subr.mxu0 0.0
    %641 = vmatpush2.msra.mxu0 0.0
    %642 = vmatprep.subr.mxu0 0.0
    %643 = vmatpush2.msra.mxu0 0.0
    %644 = vmatprep.subr.mxu0 0.0
    %645 = vmatpush2.msra.mxu0 0.0
    %646 = vmatprep.subr.mxu0 0.0
    %647 = vmatpush2.msra.mxu0 0.0
    %648 = vmatprep.subr.mxu0 0.0
    %649 = vmatpush2.msra.mxu0 0.0
    %650 = vmatprep.subr.mxu0 0.0
    %651 = vmatpush2.msra.mxu0 0.0
    %652 = vmatprep.subr.mxu0 0.0
    %653 = vmatpush2.msra.mxu0 0.0
    %654 = vmatprep.mubr.f32.mxu0 0.0
    %655 = vmatmul.mubr.f32.gmra.mxu0 %v588
    %v656 = vpop.f32.mrf.mxu0
    %v657 = vadd.f32 0.0, %v656
    %v658 = vpop.f32.mrf.mxu0
    %659 = vdwg.mxu0
    %v660 = vadd.f32 %v98, %v657
    %v661 = vtanh.pop %v660
    %662 = vrot.lane.b32.xlu0 %v34, 112
    %v663 = vpop.permute.xlu0 %662
    %v665 = vmul.f32 %v661, %v663
    %v666 = vadd.f32 %v585, %v665
    %v667 = vadd.f32 %v586, %v34
    %v669 = vsel %vm100, %v661, 0
    %671 = vmatprep.subr.mxu0 0.0
    %672 = vmatpush1.msra.mxu0 0.0
    %673 = vmatprep.subr.mxu0 0.0
    %674 = vmatpush1.msra.mxu0 0.0
    %675 = vmatprep.subr.mxu0 0.0
    %676 = vmatpush1.msra.mxu0 0.0
    %677 = vmatprep.subr.mxu0 0.0
    %678 = vmatpush1.msra.mxu0 0.0
    %679 = vmatprep.subr.mxu0 0.0
    %680 = vmatpush1.msra.mxu0 0.0
    %681 = vmatprep.subr.mxu0 0.0
    %682 = vmatpush1.msra.mxu0 0.0
    %683 = vmatprep.subr.mxu0 0.0
    %684 = vmatpush1.msra.mxu0 0.0
    %685 = vmatprep.subr.mxu0 0.0
    %686 = vmatpush1.msra.mxu0 0.0
    %687 = vmatprep.subr.mxu0 0.0
    %688 = vmatpush1.msra.mxu0 0.0
    %689 = vmatprep.subr.mxu0 0.0
    %690 = vmatpush1.msra.mxu0 0.0
    %691 = vmatprep.subr.mxu0 0.0
    %692 = vmatpush1.msra.mxu0 0.0
    %693 = vmatprep.subr.mxu0 0.0
    %694 = vmatpush1.msra.mxu0 0.0
    %695 = vmatprep.subr.mxu0 0.0
    %696 = vmatpush1.msra.mxu0 0.0
    %697 = vmatprep.subr.mxu0 0.0
    %698 = vmatpush1.msra.mxu0 0.0
    %699 = vmatprep.subr.mxu0 0.0
    %700 = vmatpush1.msra.mxu0 %v23
    %701 = vmatprep.subr.mxu0 0.0
    %702 = vmatpush1.msra.mxu0 %v22
    %703 = vmatprep.subr.mxu0 0.0
    %704 = vmatpush2.msra.mxu0 0.0
    %705 = vmatprep.subr.mxu0 0.0
    %706 = vmatpush2.msra.mxu0 0.0
    %707 = vmatprep.subr.mxu0 0.0
    %708 = vmatpush2.msra.mxu0 0.0
    %709 = vmatprep.subr.mxu0 0.0
    %710 = vmatpush2.msra.mxu0 0.0
    %711 = vmatprep.subr.mxu0 0.0
    %712 = vmatpush2.msra.mxu0 0.0
    %713 = vmatprep.subr.mxu0 0.0
    %714 = vmatpush2.msra.mxu0 0.0
    %715 = vmatprep.subr.mxu0 0.0
    %716 = vmatpush2.msra.mxu0 0.0
    %717 = vmatprep.subr.mxu0 0.0
    %718 = vmatpush2.msra.mxu0 0.0
    %719 = vmatprep.subr.mxu0 0.0
    %720 = vmatpush2.msra.mxu0 0.0
    %721 = vmatprep.subr.mxu0 0.0
    %722 = vmatpush2.msra.mxu0 0.0
    %723 = vmatprep.subr.mxu0 0.0
    %724 = vmatpush2.msra.mxu0 0.0
    %725 = vmatprep.subr.mxu0 0.0
    %726 = vmatpush2.msra.mxu0 0.0
    %727 = vmatprep.subr.mxu0 0.0
    %728 = vmatpush2.msra.mxu0 0.0
    %729 = vmatprep.subr.mxu0 0.0
    %730 = vmatpush2.msra.mxu0 0.0
    %731 = vmatprep.subr.mxu0 0.0
    %732 = vmatpush2.msra.mxu0 0.0
    %733 = vmatprep.subr.mxu0 0.0
    %734 = vmatpush2.msra.mxu0 0.0
    %735 = vmatprep.mubr.f32.mxu0 0.0
    %736 = vmatmul.mubr.f32.gmra.mxu0 %v669
    %v737 = vpop.f32.mrf.mxu0
    %v738 = vadd.f32 0.0, %v737
    %v739 = vpop.f32.mrf.mxu0
    %740 = vdwg.mxu0
    %v741 = vadd.f32 %v99, %v738
    %v742 = vtanh.pop %v741
    %743 = vrot.lane.b32.xlu0 %v35, 112
    %v744 = vpop.permute.xlu0 %743
    %v746 = vmul.f32 %v742, %v744
    %v747 = vadd.f32 %v666, %v746
    %v748 = vadd.f32 %v667, %v35
    %vm749 = vcmp.eq.f32.partialorder %v748, 0.0
    %v750 = vsel %vm749, 1e-08, %v748
    %752 = vrot.lane.b32.xlu0 %v750, 112
    %v753 = vpop.permute.xlu0 %752
    %v755 = vrcp.pop %v753
    %v756 = vmul.f32 %v747, %v755
    %v757 = vlaneseq
    %v758 = vshrl.u32 %v757, 7
    %v759 = vsub.s32 0, %v758
    %v760 = vrot.slane %v26, %v759
    %v761 = vmul.f32 %v756, %v760
    %v762 = vsel %vm100, %v761, 0.0
    %763 = vadd.xlane.f32.xlu0 %v762
    %v764 = vpop.xlane.xlu0 %763
    %v765 = vlaneseq
    %v766 = vshrl.u32 %v765, 7
    %v767 = vsub.s32 0, %v766
    %v768 = vrot.slane %v27, %v767
    %v769 = vadd.f32 %v764, %v768
    %vm770 = vcmask 7168
    %771 = vst.msk [vmem:[%s1] sm:$0xff] %vm770, %v769
    // Predicated region
    $region10: #{tpu_custom_call.1} parent=1 // pred_check
      _
    $region11: #{tpu_custom_call.1} parent=1 // pred_check_branch
      %773 = sbr.rel (0) target = $region13
    $region12: #{tpu_custom_call.1} parent=1 // pred_region
      _
    $region13: #{tpu_custom_call.1} parent=1 // pred_fallthru
      _
    // Predicated region
    $region14: #{tpu_custom_call.1} parent=1 // pred_check
      _
    $region15: #{tpu_custom_call.1} parent=1 // pred_check_branch
      %775 = sbr.rel (0) target = $region17
    $region16: #{tpu_custom_call.1} parent=1 // pred_region
      _
    $region17: #{tpu_custom_call.1} parent=1 // pred_fallthru
      _
    %776 = vsyncpa [#allocation3], 1

</llo_original>
